<compile_context>
chip_gen: v7x
topology: tpu7x:2x2x1
jax: 0.10.0
libtpu: 0.0.40
codegen_flags: <defaults>
</compile_context>

<pallas_src>
import jax
import jax.numpy as jnp
from jax.experimental import pallas as pl
from jax.experimental.pallas import tpu as pltpu  # noqa: F401  (TPU backend)


def ln_kernel(x_ref, w_ref, o_ref):
    # x_ref: [B, K]  (K on the lane axis)
    # w_ref: [N, K]  torch layout, K on the lane axis (lane-dense)
    # o_ref: [B, N]
    x = x_ref[...].astype(jnp.float32)
    w = w_ref[...].astype(jnp.float32)

    n_out = o_ref.shape[1]  # static (2)
    # Per-output-column VPU multiply + XLU lane reduction over K.  MXU is
    # skipped on purpose (M=N=2 -> pure latency, no throughput to be had).
    cols = [
        jnp.sum(x * w[n:n + 1, :], axis=1, keepdims=True)  # [B, 1]
        for n in range(n_out)
    ]
    o_ref[...] = jnp.concatenate(cols, axis=1).astype(o_ref.dtype)


def ln_forward(x, weight, bias):
    """x: [B, C, H, W]; weight: [out, in] (torch layout); bias: [out]."""
    B = x.shape[0]
    out_features, in_features = weight.shape

    # Glue: flatten like torch .view on NCHW-contiguous data (free reshape).
    x_flat = x.reshape(B, in_features)

    itemsize = jnp.dtype(x.dtype).itemsize
    cost = pl.CostEstimate(
        flops=2 * B * in_features * out_features,
        transcendentals=0,
        bytes_accessed=(x_flat.size + weight.size + B * out_features) * itemsize,
    )

    out = pl.pallas_call(
        ln_kernel,
        out_shape=jax.ShapeDtypeStruct((B, out_features), x.dtype),
        in_specs=[
            # Full-array single tiles (block == array dims, so the (8,128)
            # divisibility rule does not apply).
            pl.BlockSpec((B, in_features), lambda: (0, 0)),
            # Weight kept in its [N, K] torch layout: K lane-dense, no transpose.
            pl.BlockSpec((out_features, in_features), lambda: (0, 0)),
        ],
        out_specs=pl.BlockSpec((B, out_features), lambda: (0, 0)),
        cost_estimate=cost,
    )(x_flat, weight)

    # Bias add folded into the wrapper: avoids an (8,128)-padded VMEM operand,
    # a DMA, and a double-buffer slot just for 2 scalars.
    return out + bias


if __name__ == "__main__":
    img_size = 16
    B = 2
    in_features = img_size * img_size * 3   # 768
    out_features = 2

    key = jax.random.PRNGKey(0)
    kx, kw, kb = jax.random.split(key, 3)

    # Input in NCHW like PyTorch.
    x = jax.random.normal(kx, (B, 3, img_size, img_size), dtype=jnp.float32)

    # Deterministic PyTorch-style Linear init: U(-1/sqrt(in), 1/sqrt(in)).
    bound = 1.0 / (in_features ** 0.5)
    weight = jax.random.uniform(
        kw, (out_features, in_features), minval=-bound, maxval=bound,
        dtype=jnp.float32)
    bias = jax.random.uniform(
        kb, (out_features,), minval=-bound, maxval=bound, dtype=jnp.float32)

    out = ln_forward(x, weight, bias)
    out = jax.block_until_ready(out)

    # Pure-JAX reference check of the forward semantics.
    ref = x.reshape(B, -1) @ weight.T + bias
    assert out.shape == (B, out_features)
    assert jnp.allclose(out, ref, atol=1e-5, rtol=1e-5)

    print("KERNEL_OK")
</pallas_src>

<mosaic_0001>
module attributes {stable_mosaic.version = 11 : i64} {
  func.func @ln_kernel(%arg0: memref<2x768xf32, #tpu.memory_space<vmem>>, %arg1: memref<2x768xf32, #tpu.memory_space<vmem>>, %arg2: memref<2x2xf32, #tpu.memory_space<vmem>>) attributes {dimension_semantics = [], scalar_prefetch = 0 : i64, scratch_operands = 0 : i64, tpu.core_type = #tpu.core_type<tc>} {
    %c0 = arith.constant 0 : index
    %c0_0 = arith.constant 0 : index
    %0 = vector.load %arg0[%c0, %c0_0] : memref<2x768xf32, #tpu.memory_space<vmem>>, vector<2x768xf32>
    %c0_1 = arith.constant 0 : index
    %c0_2 = arith.constant 0 : index
    %1 = vector.load %arg1[%c0_1, %c0_2] : memref<2x768xf32, #tpu.memory_space<vmem>>, vector<2x768xf32>
    %2 = vector.extract_strided_slice %1 {offsets = [0, 0], sizes = [1, 768], strides = [1, 1]} : vector<2x768xf32> to vector<1x768xf32>
    %3 = vector.broadcast %2 : vector<1x768xf32> to vector<2x768xf32>
    %4 = arith.mulf %0, %3 : vector<2x768xf32>
    %cst = arith.constant dense<0.000000e+00> : vector<2xf32>
    %5 = vector.multi_reduction <add>, %4, %cst [1] : vector<2x768xf32> to vector<2xf32>
    %6 = vector.shape_cast %5 : vector<2xf32> to vector<2x1xf32>
    %7 = vector.extract_strided_slice %1 {offsets = [1, 0], sizes = [1, 768], strides = [1, 1]} : vector<2x768xf32> to vector<1x768xf32>
    %8 = vector.broadcast %7 : vector<1x768xf32> to vector<2x768xf32>
    %9 = arith.mulf %0, %8 : vector<2x768xf32>
    %cst_3 = arith.constant dense<0.000000e+00> : vector<2xf32>
    %10 = vector.multi_reduction <add>, %9, %cst_3 [1] : vector<2x768xf32> to vector<2xf32>
    %11 = vector.shape_cast %10 : vector<2xf32> to vector<2x1xf32>
    %12 = tpu.concatenate %6, %11 in 1 : vector<2x1xf32>, vector<2x1xf32> -> vector<2x2xf32>
    %c0_4 = arith.constant 0 : index
    %c0_5 = arith.constant 0 : index
    %13 = vector.load %arg2[%c0_4, %c0_5] : memref<2x2xf32, #tpu.memory_space<vmem>>, vector<2x2xf32>
    tpu.vector_store %arg2[%c0_4, %c0_5], %12 {strides = array<i32>} : memref<2x2xf32, #tpu.memory_space<vmem>>, vector<2x2xf32>,
    return
  }
}

</mosaic_0001>

<llo_original>
// kernel: tpu_custom_call.1
$region0: #{tpu_custom_call.1}
  #allocation0 [shape = 'u32[]', space=smem, size = 0x4, offset = 0x4, fixed_abs, tag = 'smem constant byte address 0x4 - core index']
  #allocation1 [shape = 'u32[144,128]{1,0:T(1,128)}', space=vmem, size = 0x12000, scoped, tag = 'internal scratch']
  %s0 = inlined_call_operand.hbm [shape: f32[2,768], index: 0, kind: input, shape index: {}]
  %s1 = inlined_call_operand.hbm [shape: f32[2,768], index: 1, kind: input, shape index: {}]
  %s2 = inlined_call_operand.hbm [shape: f32[2,2], index: 2, kind: output, shape index: {}]
  %s3 = sld [smem:[#allocation0]]
  $region26: #{tpu_custom_call.1} parent=0
    _
  %s5 = ssub.s32 1, %s3
  %s6 = scalar_select 0, %s5, %s3
  $region1: #{tpu_custom_call.1} parent=0
    #allocation2 [shape = 'u8[6144]{0}', space=vmem, size = 0x1800, scoped, tag = 'input window, operand 0, single buffered']
    #allocation3 [shape = 's32[1]{0}', space=sflag, size = 0x4, scoped, tag = 'scoped memory for tpu_custom_call.1']
    #allocation4 [shape = 's32[1]{0}', space=sflag, size = 0x4, scoped, tag = 'scoped memory for tpu_custom_call.1']
    #allocation5 [shape = 'u8[6144]{0}', space=vmem, size = 0x1800, scoped, tag = 'input window, operand 1, single buffered']
    #allocation6 [shape = 's32[1]{0}', space=sflag, size = 0x4, scoped, tag = 'scoped memory for tpu_custom_call.1']
    #allocation7 [shape = 'u8[1024]{0}', space=vmem, size = 0x400, scoped, tag = 'output window, operand 0, single buffered']
    %7 = vsyncpa [#allocation3], 0
    %8 = vsyncpa [#allocation6], 0
    %9 = vsyncpa [#allocation4], 0
    // Predicated region
    $region2: #{tpu_custom_call.1} parent=1 // pred_check
      _
    $region3: #{tpu_custom_call.1} parent=1 // pred_check_branch
      %11 = sbr.rel (0) target = $region5
    $region4: #{tpu_custom_call.1} parent=1 // pred_region
      %s13 = ssub.s32 192, 192
      %14 = vsyncadd [#allocation3], %s13
      %s16 = sshll.u32 [#allocation2], 4
      %s17 = int_to_ptr.vmem [resolvable:$true] %s16
      %19 = dma.hbm_to_vmem [thread:$0]  %s0, 192, %s17, [#allocation3]
    $region5: #{tpu_custom_call.1} parent=1 // pred_fallthru
      _
    // Predicated region
    $region6: #{tpu_custom_call.1} parent=1 // pred_check
      _
    $region7: #{tpu_custom_call.1} parent=1 // pred_check_branch
      %21 = sbr.rel (0) target = $region9
    $region8: #{tpu_custom_call.1} parent=1 // pred_region
      %s23 = ssub.s32 192, 192
      %24 = vsyncadd [#allocation6], %s23
      %s26 = sshll.u32 [#allocation5], 4
      %s27 = int_to_ptr.vmem [resolvable:$true] %s26
      %29 = dma.hbm_to_vmem [thread:$0]  %s1, 192, %s27, [#allocation6]
    $region9: #{tpu_custom_call.1} parent=1 // pred_fallthru
      _
    // Predicated region
    $region10: #{tpu_custom_call.1} parent=1 // pred_check
      _
    $region11: #{tpu_custom_call.1} parent=1 // pred_check_branch
      %31 = sbr.rel (0) target = $region13
    $region12: #{tpu_custom_call.1} parent=1 // pred_region
      %32 = dma.done [#allocation3], 192
    $region13: #{tpu_custom_call.1} parent=1 // pred_fallthru
      _
    // Predicated region
    $region14: #{tpu_custom_call.1} parent=1 // pred_check
      _
    $region15: #{tpu_custom_call.1} parent=1 // pred_check_branch
      %34 = sbr.rel (0) target = $region17
    $region16: #{tpu_custom_call.1} parent=1 // pred_region
      %35 = dma.done [#allocation6], 192
    $region17: #{tpu_custom_call.1} parent=1 // pred_fallthru
      _
    %v36 = vld [vmem:[#allocation2] sm:$0xff]
    %v37 = vld [vmem:[#allocation2 + $0x8] sm:$0xf]
    %v38 = vld [vmem:[#allocation5] sm:$0xff]
    %v39 = vld [vmem:[#allocation5 + $0x8] sm:$0xf]
    %v42 = vlaneseq
    %v43 = vshrl.u32 %v42, 7
    %v44 = vsub.s32 0, %v43
    %v45 = vrot.slane %v38, %v44
    %v46 = vlaneseq
    %v47 = vshrl.u32 %v46, 7
    %v48 = vsub.s32 2, %v47
    %v49 = vrot.slane %v38, %v48
    %v50 = vlaneseq
    %v51 = vshrl.u32 %v50, 7
    %v52 = vsub.s32 4, %v51
    %v53 = vrot.slane %v38, %v52
    %v54 = vlaneseq
    %v55 = vshrl.u32 %v54, 7
    %v56 = vsub.s32 6, %v55
    %v57 = vrot.slane %v38, %v56
    %v58 = vlaneseq
    %v59 = vshrl.u32 %v58, 7
    %v60 = vsub.s32 0, %v59
    %v61 = vrot.slane %v39, %v60
    %v62 = vlaneseq
    %v63 = vshrl.u32 %v62, 7
    %v64 = vsub.s32 2, %v63
    %v65 = vrot.slane %v39, %v64
    %v72 = vlaneseq
    %v73 = vshrl.u32 %v72, 7
    %v74 = vsub.s32 0, %v73
    %v75 = vrot.slane %v45, %v74
    %v76 = vlaneseq
    %v77 = vshrl.u32 %v76, 7
    %v78 = vsub.s32 0, %v77
    %v79 = vrot.slane %v49, %v78
    %v80 = vlaneseq
    %v81 = vshrl.u32 %v80, 7
    %v82 = vsub.s32 0, %v81
    %v83 = vrot.slane %v53, %v82
    %v84 = vlaneseq
    %v85 = vshrl.u32 %v84, 7
    %v86 = vsub.s32 0, %v85
    %v87 = vrot.slane %v57, %v86
    %v88 = vlaneseq
    %v89 = vshrl.u32 %v88, 7
    %v90 = vsub.s32 0, %v89
    %v91 = vrot.slane %v61, %v90
    %v92 = vlaneseq
    %v93 = vshrl.u32 %v92, 7
    %v94 = vsub.s32 0, %v93
    %v95 = vrot.slane %v65, %v94
    %v102 = vcombine.low %v75, %v79
    %v103 = vcombine.low %v83, %v87
    %v105 = vunpack.c.l.s4 1983009808
    %v106 = vunpack.c.0.s8 %v105
    %v107 = vlaneseq
    %v108 = vshrl.u32 %v107, 7
    %v109 = vsub.s32 %v106, %v108
    %v110 = vrot.slane %v102, %v109
    %v112 = vunpack.c.l.s4 1983009808
    %v113 = vunpack.c.0.s8 %v112
    %v114 = vlaneseq
    %v115 = vshrl.u32 %v114, 7
    %v116 = vsub.s32 %v113, %v115
    %v117 = vrot.slane %v103, %v116
    %v118 = vcombine.low %v110, %v117
    %v119 = vcombine.low %v91, %v95
    %v121 = vunpack.c.l.s4 1983009808
    %v122 = vunpack.c.0.s8 %v121
    %v123 = vlaneseq
    %v124 = vshrl.u32 %v123, 7
    %v125 = vsub.s32 %v122, %v124
    %v126 = vrot.slane %v119, %v125
    %v129 = vmul.f32 %v36, %v118
    %v130 = vmul.f32 %v37, %v126
    %v133 = vcombine.high %v129, %v129
    %v135 = vunpack.c.l.s4 1983009808
    %v136 = vunpack.c.0.s8 %v135
    %v137 = vlaneseq
    %v138 = vshrl.u32 %v137, 7
    %v139 = vsub.s32 %v136, %v138
    %v140 = vrot.slane %v129, %v139
    %v142 = vunpack.c.l.s4 1983009808
    %v143 = vunpack.c.0.s8 %v142
    %v144 = vlaneseq
    %v145 = vshrl.u32 %v144, 7
    %v146 = vsub.s32 %v143, %v145
    %v147 = vrot.slane %v133, %v146
    %v148 = vcombine.high %v140, %v140
    %v149 = vcombine.high %v147, %v147
    %v151 = vunpack.c.l.s4 1983009808
    %v152 = vunpack.c.0.s8 %v151
    %v153 = vlaneseq
    %v154 = vshrl.u32 %v153, 7
    %v155 = vsub.s32 %v152, %v154
    %v156 = vrot.slane %v130, %v155
    %v157 = vcombine.high %v156, %v156
    %vm164 = vcmask 1041408
    %v165 = vsel %vm164, %v140, 0.0
    %v166 = vsel %vm164, %v148, 0.0
    %v167 = vadd.f32 %v165, %v166
    %v168 = vsel %vm164, %v147, 0.0
    %v169 = vadd.f32 %v167, %v168
    %v170 = vsel %vm164, %v149, 0.0
    %v171 = vadd.f32 %v169, %v170
    %v172 = vsel %vm164, %v156, 0.0
    %v173 = vadd.f32 %v171, %v172
    %v174 = vsel %vm164, %v157, 0.0
    %v175 = vadd.f32 %v173, %v174
    %176 = vadd.xlane.f32.xlu0 %v175
    %v177 = vpop.xlane.xlu0 %176
    %v178 = vlaneseq
    %v179 = vshrl.u32 %v178, 7
    %v180 = vsub.s32 1, %v179
    %v181 = vrot.slane %v38, %v180
    %v182 = vlaneseq
    %v183 = vshrl.u32 %v182, 7
    %v184 = vsub.s32 3, %v183
    %v185 = vrot.slane %v38, %v184
    %v186 = vlaneseq
    %v187 = vshrl.u32 %v186, 7
    %v188 = vsub.s32 5, %v187
    %v189 = vrot.slane %v38, %v188
    %v190 = vlaneseq
    %v191 = vshrl.u32 %v190, 7
    %v192 = vsub.s32 7, %v191
    %v193 = vrot.slane %v38, %v192
    %v194 = vlaneseq
    %v195 = vshrl.u32 %v194, 7
    %v196 = vsub.s32 1, %v195
    %v197 = vrot.slane %v39, %v196
    %v198 = vlaneseq
    %v199 = vshrl.u32 %v198, 7
    %v200 = vsub.s32 3, %v199
    %v201 = vrot.slane %v39, %v200
    %v208 = vlaneseq
    %v209 = vshrl.u32 %v208, 7
    %v210 = vsub.s32 1, %v209
    %v211 = vrot.slane %v181, %v210
    %v212 = vlaneseq
    %v213 = vshrl.u32 %v212, 7
    %v214 = vsub.s32 1, %v213
    %v215 = vrot.slane %v185, %v214
    %v216 = vlaneseq
    %v217 = vshrl.u32 %v216, 7
    %v218 = vsub.s32 1, %v217
    %v219 = vrot.slane %v189, %v218
    %v220 = vlaneseq
    %v221 = vshrl.u32 %v220, 7
    %v222 = vsub.s32 1, %v221
    %v223 = vrot.slane %v193, %v222
    %v224 = vlaneseq
    %v225 = vshrl.u32 %v224, 7
    %v226 = vsub.s32 1, %v225
    %v227 = vrot.slane %v197, %v226
    %v228 = vlaneseq
    %v229 = vshrl.u32 %v228, 7
    %v230 = vsub.s32 1, %v229
    %v231 = vrot.slane %v201, %v230
    %v238 = vcombine.low %v211, %v215
    %v239 = vcombine.low %v219, %v223
    %v241 = vunpack.c.l.s4 1983009808
    %v242 = vunpack.c.0.s8 %v241
    %v243 = vlaneseq
    %v244 = vshrl.u32 %v243, 7
    %v245 = vsub.s32 %v242, %v244
    %v246 = vrot.slane %v238, %v245
    %v248 = vunpack.c.l.s4 1983009808
    %v249 = vunpack.c.0.s8 %v248
    %v250 = vlaneseq
    %v251 = vshrl.u32 %v250, 7
    %v252 = vsub.s32 %v249, %v251
    %v253 = vrot.slane %v239, %v252
    %v254 = vcombine.low %v246, %v253
    %v255 = vcombine.low %v227, %v231
    %v257 = vunpack.c.l.s4 1983009808
    %v258 = vunpack.c.0.s8 %v257
    %v259 = vlaneseq
    %v260 = vshrl.u32 %v259, 7
    %v261 = vsub.s32 %v258, %v260
    %v262 = vrot.slane %v255, %v261
    %v265 = vmul.f32 %v36, %v254
    %v266 = vmul.f32 %v37, %v262
    %v269 = vcombine.high %v265, %v265
    %v271 = vunpack.c.l.s4 1983009808
    %v272 = vunpack.c.0.s8 %v271
    %v273 = vlaneseq
    %v274 = vshrl.u32 %v273, 7
    %v275 = vsub.s32 %v272, %v274
    %v276 = vrot.slane %v265, %v275
    %v278 = vunpack.c.l.s4 1983009808
    %v279 = vunpack.c.0.s8 %v278
    %v280 = vlaneseq
    %v281 = vshrl.u32 %v280, 7
    %v282 = vsub.s32 %v279, %v281
    %v283 = vrot.slane %v269, %v282
    %v284 = vcombine.high %v276, %v276
    %v285 = vcombine.high %v283, %v283
    %v287 = vunpack.c.l.s4 1983009808
    %v288 = vunpack.c.0.s8 %v287
    %v289 = vlaneseq
    %v290 = vshrl.u32 %v289, 7
    %v291 = vsub.s32 %v288, %v290
    %v292 = vrot.slane %v266, %v291
    %v293 = vcombine.high %v292, %v292
    %v300 = vsel %vm164, %v276, 0.0
    %v301 = vsel %vm164, %v284, 0.0
    %v302 = vadd.f32 %v300, %v301
    %v303 = vsel %vm164, %v283, 0.0
    %v304 = vadd.f32 %v302, %v303
    %v305 = vsel %vm164, %v285, 0.0
    %v306 = vadd.f32 %v304, %v305
    %v307 = vsel %vm164, %v292, 0.0
    %v308 = vadd.f32 %v306, %v307
    %v309 = vsel %vm164, %v293, 0.0
    %v310 = vadd.f32 %v308, %v309
    %311 = vadd.xlane.f32.xlu0 %v310
    %v312 = vpop.xlane.xlu0 %311
    %vm313 = vcmask 7168
    %v314 = vsel %vm313, %v177, %v312
    %vm315 = vcmask 9216
    %316 = vst.msk [vmem:[#allocation7] sm:$0x3] %vm315, %v314
    // Predicated region
    $region18: #{tpu_custom_call.1} parent=1 // pred_check
      _
    $region19: #{tpu_custom_call.1} parent=1 // pred_check_branch
      %318 = sbr.rel (0) target = $region21
    $region20: #{tpu_custom_call.1} parent=1 // pred_region
      %s320 = ssub.s32 32, 32
      %321 = vsyncadd [#allocation4], %s320
      %s323 = sshll.u32 [#allocation7], 4
      %s324 = int_to_ptr.vmem [resolvable:$true] %s323
      %326 = dma.vmem_to_hbm [thread:$0]  %s324, 32, %s2, [#allocation4]
    $region21: #{tpu_custom_call.1} parent=1 // pred_fallthru
      _
    // Predicated region
    $region22: #{tpu_custom_call.1} parent=1 // pred_check
      _
    $region23: #{tpu_custom_call.1} parent=1 // pred_check_branch
      %328 = sbr.rel (0) target = $region25
    $region24: #{tpu_custom_call.1} parent=1 // pred_region
      %329 = dma.done [#allocation4], 32
    $region25: #{tpu_custom_call.1} parent=1 // pred_fallthru
      _
    %330 = vsyncpa [#allocation3], 1
    %331 = vsyncpa [#allocation6], 1
    %332 = vsyncpa [#allocation4], 1

</llo_original>
